<compile_context>
chip_gen: v7x
topology: tpu7x:2x2x1
jax: 0.10.0
libtpu: 0.0.40
codegen_flags: <defaults>
</compile_context>

<pallas_src>
import jax
import jax.numpy as jnp
from jax.experimental import pallas as pl
from jax.experimental.pallas import tpu as pltpu


# ----------------------------------------------------------------------------
# Pallas kernel: one lane-packed batch tile, whole forward in one pass.
#   x_ref  : (rows, pack*2dim)        rows = tile_batch / pack   (128-lane dense)
#   w1_ref : (pack*2dim, pack*width)  kron(I_pack, C1)           (resident)
#   c1_ref : (1, pack*width)          tiled (bias @ K + b)       (resident)
#   w2_ref : (pack*width, pack*2dim)  kron(I_pack, C2)           (resident)
#   out_ref: (rows, pack*2dim)
# ----------------------------------------------------------------------------
def gr_layer_kernel(x_ref, w1_ref, c1_ref, w2_ref, out_ref):
    x = x_ref[...]                                                 # (rows, 128)
    u = jnp.dot(x, w1_ref[...], preferred_element_type=jnp.float32) \
        + c1_ref[...]                                              # (rows, pack*width)
    t = jnp.tanh(u)                                                # EUP, full lanes
    out_ref[...] = x + jnp.dot(1.0 - t * t, w2_ref[...],
                               preferred_element_type=jnp.float32)


# ----------------------------------------------------------------------------
# Plain-JAX glue: parameter setup and basis construction (tiny, not hot path).
# ----------------------------------------------------------------------------
def _cdiv(a, b):
    return (a + b - 1) // b


def _round_up(a, b):
    return _cdiv(a, b) * b


def vector_to_symmetric_matrix(vector, n):
    m = jnp.zeros((n, n), jnp.float32).at[jnp.triu_indices(n)].set(vector)
    return m + m.T


def get_parameters(key, *shape, scale=0.1):
    if scale == 0.0:
        return jnp.zeros(shape, jnp.float32)
    return scale * jax.random.normal(key, shape, jnp.float32)


def init_layer_params(key, dim, width):
    n_sym = dim * (dim + 1) // 2
    ks = jax.random.split(key, 7)
    return {
        "s1": get_parameters(ks[0], n_sym, 1),
        "s2": get_parameters(ks[1], n_sym, 1),
        "s3": get_parameters(ks[2], n_sym, 1),
        "bias": get_parameters(ks[3], dim, scale=0.0),
        # ScalarNet(dim, width): K (dim, width), b (width,), a (width,)
        "K": get_parameters(ks[4], dim, width),
        "b": get_parameters(ks[5], width),
        "a": get_parameters(ks[6], width),
    }


def get_basis(params, dim, mode="odd"):
    S1 = vector_to_symmetric_matrix(params["s1"][:, 0], dim)
    S2 = vector_to_symmetric_matrix(params["s2"][:, 0], dim)
    S3 = vector_to_symmetric_matrix(params["s3"][:, 0], dim)
    A = jnp.eye(dim, dtype=jnp.float32) + S1 @ S2
    B = S1 + S1 @ S2 @ S3 + S3
    if mode == "odd":
        return A, B
    elif mode == "even":
        return B, A
    raise ValueError(f"Invalid mode: {mode}")


def _choose_tiles(batch, pack, block_batch):
    """Pick (tile_batch, padded_batch) in units of batch rows.

    Small batch -> single tile (no grid machinery, minimal padding).
    Large batch -> ~block_batch-sized tiles, balanced so the padding waste is
    < one tile and the grid gets >= 2 steps (v7x megacore sharding).
    """
    align = max(128, 8 * pack)          # lane / sublane alignment in batch rows
    block_batch = max(align, (block_batch // align) * align)
    pb_min = _round_up(batch, align)
    if pb_min <= block_batch:
        tb = pb_min
    else:
        nsteps = _cdiv(pb_min, block_batch)
        tb = _round_up(_cdiv(pb_min, nsteps), align)
    pb = _round_up(pb_min, tb)
    return tb, pb


def gr_layer_forward(x, h, params, dim, width, mode="odd", block_batch=8192):
    batch = x.shape[0]
    two_dim = 2 * dim
    assert x.shape[1] == two_dim

    A, B = get_basis(params, dim, mode)

    # ---- fold the whole layer into TWO matmuls (wrapper, HIGHEST precision) --
    hi = jax.lax.Precision.HIGHEST
    W = jnp.concatenate([A, B], axis=0)                         # (2dim, dim)
    M = h * jnp.concatenate([-B.T, A.T], axis=1)                # (dim, 2dim)
    K = params["K"]
    C1 = jnp.dot(W, K, precision=hi)                            # (2dim, width)
    c1 = jnp.dot(params["bias"], K, precision=hi) + params["b"]  # (width,)
    C2 = params["a"][:, None] * jnp.dot(K.T, M, precision=hi)    # (width, 2dim)

    # ---- lane packing: `pack` batch rows per 128-wide packed row -------------
    pack = 128 // two_dim if (two_dim <= 128 and 128 % two_dim == 0) else 1
    eye_p = jnp.eye(pack, dtype=jnp.float32)
    W1 = jnp.kron(eye_p, C1)                                    # (pack*2dim, pack*width)
    W2 = jnp.kron(eye_p, C2)                                    # (pack*width, pack*2dim)
    c1t = jnp.tile(c1, pack).reshape(1, pack * width)

    # ---- batch tiling ---------------------------------------------------------
    tb, pb = _choose_tiles(batch, pack, block_batch)
    xp = x if pb == batch else jnp.pad(x, ((0, pb - batch), (0, 0)))
    xp = xp.reshape(pb // pack, pack * two_dim)                 # free contiguous reshape

    rows = tb // pack                                           # packed rows per tile
    const = lambda shape: pl.BlockSpec(shape, lambda i: (0, 0))  # resident weights

    out = pl.pallas_call(
        gr_layer_kernel,
        out_shape=jax.ShapeDtypeStruct((pb // pack, pack * two_dim), jnp.float32),
        grid=(pb // tb,),
        in_specs=[
            pl.BlockSpec((rows, pack * two_dim), lambda i: (i, 0)),   # x tile
            const(W1.shape), const(c1t.shape), const(W2.shape),
        ],
        out_specs=pl.BlockSpec((rows, pack * two_dim), lambda i: (i, 0)),
        compiler_params=pltpu.CompilerParams(
            dimension_semantics=("parallel",),
            vmem_limit_bytes=32 * 1024 * 1024),
    )(xp, W1, c1t, W2)

    out = out.reshape(pb, two_dim)
    return out if pb == batch else out[:batch]


# Pure-JAX reference for a sanity check (mirrors the PyTorch forward; HIGHEST
# precision so it is as close to exact f32 as the TPU allows).
def gr_layer_reference(x, h, params, dim, width, mode="odd"):
    hi = jax.lax.Precision.HIGHEST
    A, B = get_basis(params, dim, mode)
    p, q = x[:, :dim], x[:, dim:]
    z = jnp.dot(p, A, precision=hi) + jnp.dot(q, B, precision=hi) \
        + params["bias"][None, :]
    u = jnp.dot(z, params["K"], precision=hi) + params["b"][None, :]
    t = jnp.tanh(u)
    g = jnp.dot((1.0 - t * t) * params["a"][None, :], params["K"].T, precision=hi)
    p = p - h * jnp.dot(g, B.T, precision=hi)
    q = q + h * jnp.dot(g, A.T, precision=hi)
    return jnp.concatenate([p, q], axis=-1)


if __name__ == "__main__":
    dim, width = 4, 32
    h = 0.1

    key = jax.random.PRNGKey(0)
    k_params, k_x1, k_x2 = jax.random.split(key, 3)
    params = init_layer_params(k_params, dim, width)

    # Tolerance note: the kernel's MXU matmuls run at default (bf16-pass)
    # precision while the reference runs at HIGHEST, so allow ~1e-3-level slack.
    ATOL = RTOL = 2e-3

    # Small batch: single-tile fast path (batch padded 8 -> 128, grid of 1).
    x1 = jax.random.normal(k_x1, (8, 2 * dim), jnp.float32)
    out1 = jax.block_until_ready(gr_layer_forward(x1, h, params, dim, width))
    ref1 = gr_layer_reference(x1, h, params, dim, width)
    assert out1.shape == x1.shape
    assert jnp.allclose(out1, ref1, atol=ATOL, rtol=RTOL), "mismatch (small batch)"

    # Larger batch with a small tile cap: exercises the multi-step parallel grid
    # and the padding path (260 rows -> 384 padded, 3 grid steps of 128).
    x2 = jax.random.normal(k_x2, (260, 2 * dim), jnp.float32)
    out2 = jax.block_until_ready(
        gr_layer_forward(x2, h, params, dim, width, block_batch=128))
    ref2 = gr_layer_reference(x2, h, params, dim, width)
    assert out2.shape == x2.shape
    assert jnp.allclose(out2, ref2, atol=ATOL, rtol=RTOL), "mismatch (gridded batch)"

    print("KERNEL_OK")
</pallas_src>

<mosaic_0001>
module attributes {stable_mosaic.version = 11 : i64} {
  func.func @gr_layer_kernel(%arg0: i32, %arg1: memref<8x128xf32, #tpu.memory_space<vmem>>, %arg2: memref<128x512xf32, #tpu.memory_space<vmem>>, %arg3: memref<1x512xf32, #tpu.memory_space<vmem>>, %arg4: memref<512x128xf32, #tpu.memory_space<vmem>>, %arg5: memref<8x128xf32, #tpu.memory_space<vmem>>) attributes {dimension_semantics = [#tpu.dimension_semantics<parallel>], iteration_bounds = array<i64: 1>, scalar_prefetch = 0 : i64, scratch_operands = 0 : i64, tpu.core_type = #tpu.core_type<tc>, window_params = [{transform_indices = @transform_0, window_bounds = array<i64: 8, 128>}, {pipeline_mode = #tpu.pipeline_mode<synchronous>, transform_indices = @transform_1, window_bounds = array<i64: 128, 512>}, {pipeline_mode = #tpu.pipeline_mode<synchronous>, transform_indices = @transform_2, window_bounds = array<i64: 1, 512>}, {pipeline_mode = #tpu.pipeline_mode<synchronous>, transform_indices = @transform_3, window_bounds = array<i64: 512, 128>}, {transform_indices = @transform_4, window_bounds = array<i64: 8, 128>}]} {
    %c0 = arith.constant 0 : index
    %c0_0 = arith.constant 0 : index
    %0 = vector.load %arg1[%c0, %c0_0] : memref<8x128xf32, #tpu.memory_space<vmem>>, vector<8x128xf32>
    %c0_1 = arith.constant 0 : index
    %c0_2 = arith.constant 0 : index
    %1 = vector.load %arg2[%c0_1, %c0_2] : memref<128x512xf32, #tpu.memory_space<vmem>>, vector<128x512xf32>
    %cst = arith.constant dense<0.000000e+00> : vector<8x512xf32>
    %2 = tpu.matmul %0, %1, %cst {dimension_numbers = #tpu.dot_dimension_numbers<[1], [0], [0], [1], [0, 0, 1, 1], [], []>} : vector<8x128xf32>, vector<128x512xf32>, vector<8x512xf32> -> vector<8x512xf32>
    %c0_3 = arith.constant 0 : index
    %c0_4 = arith.constant 0 : index
    %3 = vector.load %arg3[%c0_3, %c0_4] : memref<1x512xf32, #tpu.memory_space<vmem>>, vector<1x512xf32>
    %4 = vector.broadcast %3 : vector<1x512xf32> to vector<8x512xf32>
    %5 = arith.addf %2, %4 : vector<8x512xf32>
    %6 = math.tanh %5 : vector<8x512xf32>
    %7 = arith.mulf %6, %6 : vector<8x512xf32>
    %cst_5 = arith.constant 1.000000e+00 : f32
    %8 = vector.broadcast %cst_5 : f32 to vector<8x512xf32>
    %9 = arith.subf %8, %7 : vector<8x512xf32>
    %c0_6 = arith.constant 0 : index
    %c0_7 = arith.constant 0 : index
    %10 = vector.load %arg4[%c0_6, %c0_7] : memref<512x128xf32, #tpu.memory_space<vmem>>, vector<512x128xf32>
    %cst_8 = arith.constant dense<0.000000e+00> : vector<8x128xf32>
    %11 = tpu.matmul %9, %10, %cst_8 {dimension_numbers = #tpu.dot_dimension_numbers<[1], [0], [0], [1], [0, 0, 1, 1], [], []>} : vector<8x512xf32>, vector<512x128xf32>, vector<8x128xf32> -> vector<8x128xf32>
    %12 = arith.addf %0, %11 : vector<8x128xf32>
    %c0_9 = arith.constant 0 : index
    %c0_10 = arith.constant 0 : index
    %13 = vector.load %arg5[%c0_9, %c0_10] : memref<8x128xf32, #tpu.memory_space<vmem>>, vector<8x128xf32>
    tpu.vector_store %arg5[%c0_9, %c0_10], %12 {strides = array<i32>} : memref<8x128xf32, #tpu.memory_space<vmem>>, vector<8x128xf32>,
    return
  }
  func.func @transform_0(%arg0: i32) -> (i32, i32) {
    %c0_i32 = arith.constant 0 : i32
    %c0_i32_0 = arith.constant 0 : i32
    return %arg0, %c0_i32 : i32, i32
  }
  func.func @transform_1(%arg0: i32) -> (i32, i32) {
    %c0_i32 = arith.constant 0 : i32
    %c0_i32_0 = arith.constant 0 : i32
    %c0_i32_1 = arith.constant 0 : i32
    return %c0_i32, %c0_i32_0 : i32, i32
  }
  func.func @transform_2(%arg0: i32) -> (i32, i32) {
    %c0_i32 = arith.constant 0 : i32
    %c0_i32_0 = arith.constant 0 : i32
    %c0_i32_1 = arith.constant 0 : i32
    return %c0_i32, %c0_i32_0 : i32, i32
  }
  func.func @transform_3(%arg0: i32) -> (i32, i32) {
    %c0_i32 = arith.constant 0 : i32
    %c0_i32_0 = arith.constant 0 : i32
    %c0_i32_1 = arith.constant 0 : i32
    return %c0_i32, %c0_i32_0 : i32, i32
  }
  func.func @transform_4(%arg0: i32) -> (i32, i32) {
    %c0_i32 = arith.constant 0 : i32
    %c0_i32_0 = arith.constant 0 : i32
    return %arg0, %c0_i32 : i32, i32
  }
}

</mosaic_0001>

<llo_original>
// kernel: tpu_custom_call.1
$region0: #{tpu_custom_call.1}
  #allocation0 [shape = 'u32[]', space=smem, size = 0x4, offset = 0x4, fixed_abs, tag = 'smem constant byte address 0x4 - core index']
  #allocation1 [shape = 'u32[144,128]{1,0:T(1,128)}', space=vmem, size = 0x12000, scoped, tag = 'internal scratch']
  %s0 = inlined_call_operand.hbm [shape: f32[8,128], index: 0, kind: input, shape index: {}]
  %s1 = inlined_call_operand.hbm [shape: f32[128,512], index: 1, kind: input, shape index: {}]
  %s2 = inlined_call_operand.vmem [shape: f32[1,512], index: 2, kind: input, shape index: {}]
  %s3 = inlined_call_operand.hbm [shape: f32[512,128], index: 3, kind: input, shape index: {}]
  %s4 = inlined_call_operand.hbm [shape: f32[8,128], index: 4, kind: output, shape index: {}]
  %s5 = sld [smem:[#allocation0]]
  $region38: #{tpu_custom_call.1} parent=0
    _
  %s7 = ssub.s32 1, %s5
  %s8 = scalar_select 0, %s7, %s5
  $region1: #{tpu_custom_call.1} parent=0
    #allocation2 [shape = 'u8[4096]{0}', space=vmem, size = 0x1000, scoped, tag = 'input window, operand 0, single buffered']
    #allocation3 [shape = 's32[1]{0}', space=sflag, size = 0x4, scoped, tag = 'scoped memory for tpu_custom_call.1']
    #allocation4 [shape = 's32[1]{0}', space=sflag, size = 0x4, scoped, tag = 'scoped memory for tpu_custom_call.1']
    #allocation5 [shape = 'u8[262144]{0}', space=vmem, size = 0x40000, scoped, tag = 'input window, operand 1, single buffered']
    #allocation6 [shape = 's32[1]{0}', space=sflag, size = 0x4, scoped, tag = 'scoped memory for tpu_custom_call.1']
    #allocation7 [shape = 'u8[262144]{0}', space=vmem, size = 0x40000, scoped, tag = 'input window, operand 3, single buffered']
    #allocation8 [shape = 'u8[4096]{0}', space=vmem, size = 0x1000, scoped, tag = 'output window, operand 0, single buffered']
    %9 = vsyncpa [#allocation3], 0
    %10 = vsyncpa [#allocation6], 0
    %11 = vsyncpa [#allocation4], 0
    // Predicated region
    $region2: #{tpu_custom_call.1} parent=1 // pred_check
      _
    $region3: #{tpu_custom_call.1} parent=1 // pred_check_branch
      %13 = sbr.rel (0) target = $region5
    $region4: #{tpu_custom_call.1} parent=1 // pred_region
      %s15 = ssub.s32 128, 128
      %16 = vsyncadd [#allocation3], %s15
      %s18 = sshll.u32 [#allocation2], 4
      %s19 = int_to_ptr.vmem [resolvable:$true] %s18
      %21 = dma.hbm_to_vmem [thread:$0]  %s0, 128, %s19, [#allocation3]
    $region5: #{tpu_custom_call.1} parent=1 // pred_fallthru
      _
    // Predicated region
    $region6: #{tpu_custom_call.1} parent=1 // pred_check
      _
    $region7: #{tpu_custom_call.1} parent=1 // pred_check_branch
      %23 = sbr.rel (0) target = $region9
    $region8: #{tpu_custom_call.1} parent=1 // pred_region
      %s25 = ssub.s32 8192, 8192
      %26 = vsyncadd [#allocation6], %s25
      %s27 = sshll.u32 [#allocation5], 4
      %s28 = int_to_ptr.vmem [resolvable:$true] %s27
      %33 = dma.hbm_to_vmem [thread:$0]  %s1, 8192, %s28, [#allocation6], 512, 512, 32
    $region9: #{tpu_custom_call.1} parent=1 // pred_fallthru
      _
    // Predicated region
    $region10: #{tpu_custom_call.1} parent=1 // pred_check
      _
    $region11: #{tpu_custom_call.1} parent=1 // pred_check_branch
      %35 = sbr.rel (0) target = $region13
    $region12: #{tpu_custom_call.1} parent=1 // pred_region
      _
    $region13: #{tpu_custom_call.1} parent=1 // pred_fallthru
      _
    // Predicated region
    $region14: #{tpu_custom_call.1} parent=1 // pred_check
      _
    $region15: #{tpu_custom_call.1} parent=1 // pred_check_branch
      %37 = sbr.rel (0) target = $region17
    $region16: #{tpu_custom_call.1} parent=1 // pred_region
      %s39 = ssub.s32 8192, 8192
      %40 = vsyncadd [#allocation6], %s39
      %s41 = sshll.u32 [#allocation7], 4
      %s42 = int_to_ptr.vmem [resolvable:$true] %s41
      %47 = dma.hbm_to_vmem [thread:$0]  %s3, 8192, %s42, [#allocation6], 128, 128, 8
    $region17: #{tpu_custom_call.1} parent=1 // pred_fallthru
      _
    // Predicated region
    $region18: #{tpu_custom_call.1} parent=1 // pred_check
      _
    $region19: #{tpu_custom_call.1} parent=1 // pred_check_branch
      %49 = sbr.rel (0) target = $region21
    $region20: #{tpu_custom_call.1} parent=1 // pred_region
      %50 = dma.done [#allocation3], 128
    $region21: #{tpu_custom_call.1} parent=1 // pred_fallthru
      _
    // Predicated region
    $region22: #{tpu_custom_call.1} parent=1 // pred_check
      _
    $region23: #{tpu_custom_call.1} parent=1 // pred_check_branch
      %52 = sbr.rel (0) target = $region25
    $region24: #{tpu_custom_call.1} parent=1 // pred_region
      %53 = dma.done [#allocation6], 8192
    $region25: #{tpu_custom_call.1} parent=1 // pred_fallthru
      _
    // Predicated region
    $region26: #{tpu_custom_call.1} parent=1 // pred_check
      _
    $region27: #{tpu_custom_call.1} parent=1 // pred_check_branch
      %55 = sbr.rel (0) target = $region29
    $region28: #{tpu_custom_call.1} parent=1 // pred_region
      %56 = dma.done [#allocation6], 8192
    $region29: #{tpu_custom_call.1} parent=1 // pred_fallthru
      _
    %v57 = vld [vmem:[#allocation2] sm:$0xff]
    %v58 = vld [vmem:[#allocation5] sm:$0xff]
    %v59 = vld [vmem:[#allocation5 + $0x8] sm:$0xff]
    %v60 = vld [vmem:[#allocation5 + $0x10] sm:$0xff]
    %v61 = vld [vmem:[#allocation5 + $0x18] sm:$0xff]
    %v62 = vld [vmem:[#allocation5 + $0x20] sm:$0xff]
    %v63 = vld [vmem:[#allocation5 + $0x28] sm:$0xff]
    %v64 = vld [vmem:[#allocation5 + $0x30] sm:$0xff]
    %v65 = vld [vmem:[#allocation5 + $0x38] sm:$0xff]
    %v66 = vld [vmem:[#allocation5 + $0x40] sm:$0xff]
    %v67 = vld [vmem:[#allocation5 + $0x48] sm:$0xff]
    %v68 = vld [vmem:[#allocation5 + $0x50] sm:$0xff]
    %v69 = vld [vmem:[#allocation5 + $0x58] sm:$0xff]
    %v70 = vld [vmem:[#allocation5 + $0x60] sm:$0xff]
    %v71 = vld [vmem:[#allocation5 + $0x68] sm:$0xff]
    %v72 = vld [vmem:[#allocation5 + $0x70] sm:$0xff]
    %v73 = vld [vmem:[#allocation5 + $0x78] sm:$0xff]
    %v74 = vld [vmem:[#allocation5 + $0x80] sm:$0xff]
    %v75 = vld [vmem:[#allocation5 + $0x88] sm:$0xff]
    %v76 = vld [vmem:[#allocation5 + $0x90] sm:$0xff]
    %v77 = vld [vmem:[#allocation5 + $0x98] sm:$0xff]
    %v78 = vld [vmem:[#allocation5 + $0xa0] sm:$0xff]
    %v79 = vld [vmem:[#allocation5 + $0xa8] sm:$0xff]
    %v80 = vld [vmem:[#allocation5 + $0xb0] sm:$0xff]
    %v81 = vld [vmem:[#allocation5 + $0xb8] sm:$0xff]
    %v82 = vld [vmem:[#allocation5 + $0xc0] sm:$0xff]
    %v83 = vld [vmem:[#allocation5 + $0xc8] sm:$0xff]
    %v84 = vld [vmem:[#allocation5 + $0xd0] sm:$0xff]
    %v85 = vld [vmem:[#allocation5 + $0xd8] sm:$0xff]
    %v86 = vld [vmem:[#allocation5 + $0xe0] sm:$0xff]
    %v87 = vld [vmem:[#allocation5 + $0xe8] sm:$0xff]
    %v88 = vld [vmem:[#allocation5 + $0xf0] sm:$0xff]
    %v89 = vld [vmem:[#allocation5 + $0xf8] sm:$0xff]
    %v90 = vld [vmem:[#allocation5 + $0x100] sm:$0xff]
    %v91 = vld [vmem:[#allocation5 + $0x108] sm:$0xff]
    %v92 = vld [vmem:[#allocation5 + $0x110] sm:$0xff]
    %v93 = vld [vmem:[#allocation5 + $0x118] sm:$0xff]
    %v94 = vld [vmem:[#allocation5 + $0x120] sm:$0xff]
    %v95 = vld [vmem:[#allocation5 + $0x128] sm:$0xff]
    %v96 = vld [vmem:[#allocation5 + $0x130] sm:$0xff]
    %v97 = vld [vmem:[#allocation5 + $0x138] sm:$0xff]
    %v98 = vld [vmem:[#allocation5 + $0x140] sm:$0xff]
    %v99 = vld [vmem:[#allocation5 + $0x148] sm:$0xff]
    %v100 = vld [vmem:[#allocation5 + $0x150] sm:$0xff]
    %v101 = vld [vmem:[#allocation5 + $0x158] sm:$0xff]
    %v102 = vld [vmem:[#allocation5 + $0x160] sm:$0xff]
    %v103 = vld [vmem:[#allocation5 + $0x168] sm:$0xff]
    %v104 = vld [vmem:[#allocation5 + $0x170] sm:$0xff]
    %v105 = vld [vmem:[#allocation5 + $0x178] sm:$0xff]
    %v106 = vld [vmem:[#allocation5 + $0x180] sm:$0xff]
    %v107 = vld [vmem:[#allocation5 + $0x188] sm:$0xff]
    %v108 = vld [vmem:[#allocation5 + $0x190] sm:$0xff]
    %v109 = vld [vmem:[#allocation5 + $0x198] sm:$0xff]
    %v110 = vld [vmem:[#allocation5 + $0x1a0] sm:$0xff]
    %v111 = vld [vmem:[#allocation5 + $0x1a8] sm:$0xff]
    %v112 = vld [vmem:[#allocation5 + $0x1b0] sm:$0xff]
    %v113 = vld [vmem:[#allocation5 + $0x1b8] sm:$0xff]
    %v114 = vld [vmem:[#allocation5 + $0x1c0] sm:$0xff]
    %v115 = vld [vmem:[#allocation5 + $0x1c8] sm:$0xff]
    %v116 = vld [vmem:[#allocation5 + $0x1d0] sm:$0xff]
    %v117 = vld [vmem:[#allocation5 + $0x1d8] sm:$0xff]
    %v118 = vld [vmem:[#allocation5 + $0x1e0] sm:$0xff]
    %v119 = vld [vmem:[#allocation5 + $0x1e8] sm:$0xff]
    %v120 = vld [vmem:[#allocation5 + $0x1f0] sm:$0xff]
    %v121 = vld [vmem:[#allocation5 + $0x1f8] sm:$0xff]
    %v122 = vld [vmem:[%s2] sm:$0xf]
    %v124 = vlaneseq
    %v125 = vshrl.u32 %v124, 7
    %v126 = vsub.s32 0, %v125
    %v127 = vrot.slane %v122, %v126
    %v128 = vlaneseq
    %v129 = vshrl.u32 %v128, 7
    %v130 = vsub.s32 1, %v129
    %v131 = vrot.slane %v122, %v130
    %v132 = vlaneseq
    %v133 = vshrl.u32 %v132, 7
    %v134 = vsub.s32 2, %v133
    %v135 = vrot.slane %v122, %v134
    %v136 = vlaneseq
    %v137 = vshrl.u32 %v136, 7
    %v138 = vsub.s32 3, %v137
    %v139 = vrot.slane %v122, %v138
    %144 = vmatprep.subr.mxu0 %v59
    %145 = vmatpush1.msra.mxu0 %v58
    %146 = vmatprep.subr.mxu0 %v63
    %147 = vmatpush1.msra.mxu0 %v62
    %148 = vmatprep.subr.mxu0 %v67
    %149 = vmatpush1.msra.mxu0 %v66
    %150 = vmatprep.subr.mxu0 %v71
    %151 = vmatpush1.msra.mxu0 %v70
    %152 = vmatprep.subr.mxu0 %v75
    %153 = vmatpush1.msra.mxu0 %v74
    %154 = vmatprep.subr.mxu0 %v79
    %155 = vmatpush1.msra.mxu0 %v78
    %156 = vmatprep.subr.mxu0 %v83
    %157 = vmatpush1.msra.mxu0 %v82
    %158 = vmatprep.subr.mxu0 %v87
    %159 = vmatpush1.msra.mxu0 %v86
    %160 = vmatprep.subr.mxu0 %v91
    %161 = vmatpush1.msra.mxu0 %v90
    %162 = vmatprep.subr.mxu0 %v95
    %163 = vmatpush1.msra.mxu0 %v94
    %164 = vmatprep.subr.mxu0 %v99
    %165 = vmatpush1.msra.mxu0 %v98
    %166 = vmatprep.subr.mxu0 %v103
    %167 = vmatpush1.msra.mxu0 %v102
    %168 = vmatprep.subr.mxu0 %v107
    %169 = vmatpush1.msra.mxu0 %v106
    %170 = vmatprep.subr.mxu0 %v111
    %171 = vmatpush1.msra.mxu0 %v110
    %172 = vmatprep.subr.mxu0 %v115
    %173 = vmatpush1.msra.mxu0 %v114
    %174 = vmatprep.subr.mxu0 %v119
    %175 = vmatpush1.msra.mxu0 %v118
    %176 = vmatprep.subr.mxu0 0.0
    %177 = vmatpush1.msra.mxu0 0.0
    %178 = vmatprep.subr.mxu0 0.0
    %179 = vmatpush1.msra.mxu0 0.0
    %180 = vmatprep.subr.mxu0 0.0
    %181 = vmatpush1.msra.mxu0 0.0
    %182 = vmatprep.subr.mxu0 0.0
    %183 = vmatpush1.msra.mxu0 0.0
    %184 = vmatprep.subr.mxu0 0.0
    %185 = vmatpush1.msra.mxu0 0.0
    %186 = vmatprep.subr.mxu0 0.0
    %187 = vmatpush1.msra.mxu0 0.0
    %188 = vmatprep.subr.mxu0 0.0
    %189 = vmatpush1.msra.mxu0 0.0
    %190 = vmatprep.subr.mxu0 0.0
    %191 = vmatpush1.msra.mxu0 0.0
    %192 = vmatprep.subr.mxu0 0.0
    %193 = vmatpush1.msra.mxu0 0.0
    %194 = vmatprep.subr.mxu0 0.0
    %195 = vmatpush1.msra.mxu0 0.0
    %196 = vmatprep.subr.mxu0 0.0
    %197 = vmatpush1.msra.mxu0 0.0
    %198 = vmatprep.subr.mxu0 0.0
    %199 = vmatpush1.msra.mxu0 0.0
    %200 = vmatprep.subr.mxu0 0.0
    %201 = vmatpush1.msra.mxu0 0.0
    %202 = vmatprep.subr.mxu0 0.0
    %203 = vmatpush1.msra.mxu0 0.0
    %204 = vmatprep.subr.mxu0 0.0
    %205 = vmatpush1.msra.mxu0 0.0
    %206 = vmatprep.subr.mxu0 0.0
    %207 = vmatpush1.msra.mxu0 0.0
    %208 = vmatprep.mubr.f32.mxu0 0.0
    %209 = vmatmul.mubr.f32.gmra.mrb[0].mxu0 %v57
    %v210 = vpop.f32.mrb[0].mxu0
    %v211 = vadd.f32 %v127, %v210
    %v212 = vpop.f32.mrb[0].mxu0
    %v213 = vadd.f32 %v131, %v212
    %214 = vdwg.mxu0
    %215 = vmatprep.subr.mxu0 %v61
    %216 = vmatpush1.msra.mxu0 %v60
    %217 = vmatprep.subr.mxu0 %v65
    %218 = vmatpush1.msra.mxu0 %v64
    %219 = vmatprep.subr.mxu0 %v69
    %220 = vmatpush1.msra.mxu0 %v68
    %221 = vmatprep.subr.mxu0 %v73
    %222 = vmatpush1.msra.mxu0 %v72
    %223 = vmatprep.subr.mxu0 %v77
    %224 = vmatpush1.msra.mxu0 %v76
    %225 = vmatprep.subr.mxu0 %v81
    %226 = vmatpush1.msra.mxu0 %v80
    %227 = vmatprep.subr.mxu0 %v85
    %228 = vmatpush1.msra.mxu0 %v84
    %229 = vmatprep.subr.mxu0 %v89
    %230 = vmatpush1.msra.mxu0 %v88
    %231 = vmatprep.subr.mxu0 %v93
    %232 = vmatpush1.msra.mxu0 %v92
    %233 = vmatprep.subr.mxu0 %v97
    %234 = vmatpush1.msra.mxu0 %v96
    %235 = vmatprep.subr.mxu0 %v101
    %236 = vmatpush1.msra.mxu0 %v100
    %237 = vmatprep.subr.mxu0 %v105
    %238 = vmatpush1.msra.mxu0 %v104
    %239 = vmatprep.subr.mxu0 %v109
    %240 = vmatpush1.msra.mxu0 %v108
    %241 = vmatprep.subr.mxu0 %v113
    %242 = vmatpush1.msra.mxu0 %v112
    %243 = vmatprep.subr.mxu0 %v117
    %244 = vmatpush1.msra.mxu0 %v116
    %245 = vmatprep.subr.mxu0 %v121
    %246 = vmatpush1.msra.mxu0 %v120
    %247 = vmatprep.subr.mxu0 0.0
    %248 = vmatpush1.msra.mxu0 0.0
    %249 = vmatprep.subr.mxu0 0.0
    %250 = vmatpush1.msra.mxu0 0.0
    %251 = vmatprep.subr.mxu0 0.0
    %252 = vmatpush1.msra.mxu0 0.0
    %253 = vmatprep.subr.mxu0 0.0
    %254 = vmatpush1.msra.mxu0 0.0
    %255 = vmatprep.subr.mxu0 0.0
    %256 = vmatpush1.msra.mxu0 0.0
    %257 = vmatprep.subr.mxu0 0.0
    %258 = vmatpush1.msra.mxu0 0.0
    %259 = vmatprep.subr.mxu0 0.0
    %260 = vmatpush1.msra.mxu0 0.0
    %261 = vmatprep.subr.mxu0 0.0
    %262 = vmatpush1.msra.mxu0 0.0
    %263 = vmatprep.subr.mxu0 0.0
    %264 = vmatpush1.msra.mxu0 0.0
    %265 = vmatprep.subr.mxu0 0.0
    %266 = vmatpush1.msra.mxu0 0.0
    %267 = vmatprep.subr.mxu0 0.0
    %268 = vmatpush1.msra.mxu0 0.0
    %269 = vmatprep.subr.mxu0 0.0
    %270 = vmatpush1.msra.mxu0 0.0
    %271 = vmatprep.subr.mxu0 0.0
    %272 = vmatpush1.msra.mxu0 0.0
    %273 = vmatprep.subr.mxu0 0.0
    %274 = vmatpush1.msra.mxu0 0.0
    %275 = vmatprep.subr.mxu0 0.0
    %276 = vmatpush1.msra.mxu0 0.0
    %277 = vmatprep.subr.mxu0 0.0
    %278 = vmatpush1.msra.mxu0 0.0
    %279 = vmatprep.mubr.f32.mxu0 0.0
    %280 = vmatmul.mubr.f32.gmra.mrb[0].mxu0 %v57
    %v281 = vpop.f32.mrb[0].mxu0
    %v282 = vadd.f32 %v135, %v281
    %v283 = vpop.f32.mrb[0].mxu0
    %v284 = vadd.f32 %v139, %v283
    %285 = vdwg.mxu0
    %v286 = vtanh.pop %v211
    %v287 = vtanh.pop %v213
    %v288 = vtanh.pop %v282
    %v289 = vtanh.pop %v284
    %v290 = vmul.f32 %v286, %v286
    %v291 = vmul.f32 %v287, %v287
    %v292 = vmul.f32 %v288, %v288
    %v293 = vmul.f32 %v289, %v289
    %v294 = vsub.f32 1.0, %v290
    %v295 = vsub.f32 1.0, %v291
    %v296 = vsub.f32 1.0, %v292
    %v297 = vsub.f32 1.0, %v293
    %v298 = vld [vmem:[#allocation7] sm:$0xff]
    %v299 = vld [vmem:[#allocation7 + $0x8] sm:$0xff]
    %v300 = vld [vmem:[#allocation7 + $0x10] sm:$0xff]
    %v301 = vld [vmem:[#allocation7 + $0x18] sm:$0xff]
    %v302 = vld [vmem:[#allocation7 + $0x20] sm:$0xff]
    %v303 = vld [vmem:[#allocation7 + $0x28] sm:$0xff]
    %v304 = vld [vmem:[#allocation7 + $0x30] sm:$0xff]
    %v305 = vld [vmem:[#allocation7 + $0x38] sm:$0xff]
    %v306 = vld [vmem:[#allocation7 + $0x40] sm:$0xff]
    %v307 = vld [vmem:[#allocation7 + $0x48] sm:$0xff]
    %v308 = vld [vmem:[#allocation7 + $0x50] sm:$0xff]
    %v309 = vld [vmem:[#allocation7 + $0x58] sm:$0xff]
    %v310 = vld [vmem:[#allocation7 + $0x60] sm:$0xff]
    %v311 = vld [vmem:[#allocation7 + $0x68] sm:$0xff]
    %v312 = vld [vmem:[#allocation7 + $0x70] sm:$0xff]
    %v313 = vld [vmem:[#allocation7 + $0x78] sm:$0xff]
    %v314 = vld [vmem:[#allocation7 + $0x80] sm:$0xff]
    %v315 = vld [vmem:[#allocation7 + $0x88] sm:$0xff]
    %v316 = vld [vmem:[#allocation7 + $0x90] sm:$0xff]
    %v317 = vld [vmem:[#allocation7 + $0x98] sm:$0xff]
    %v318 = vld [vmem:[#allocation7 + $0xa0] sm:$0xff]
    %v319 = vld [vmem:[#allocation7 + $0xa8] sm:$0xff]
    %v320 = vld [vmem:[#allocation7 + $0xb0] sm:$0xff]
    %v321 = vld [vmem:[#allocation7 + $0xb8] sm:$0xff]
    %v322 = vld [vmem:[#allocation7 + $0xc0] sm:$0xff]
    %v323 = vld [vmem:[#allocation7 + $0xc8] sm:$0xff]
    %v324 = vld [vmem:[#allocation7 + $0xd0] sm:$0xff]
    %v325 = vld [vmem:[#allocation7 + $0xd8] sm:$0xff]
    %v326 = vld [vmem:[#allocation7 + $0xe0] sm:$0xff]
    %v327 = vld [vmem:[#allocation7 + $0xe8] sm:$0xff]
    %v328 = vld [vmem:[#allocation7 + $0xf0] sm:$0xff]
    %v329 = vld [vmem:[#allocation7 + $0xf8] sm:$0xff]
    %v330 = vld [vmem:[#allocation7 + $0x100] sm:$0xff]
    %v331 = vld [vmem:[#allocation7 + $0x108] sm:$0xff]
    %v332 = vld [vmem:[#allocation7 + $0x110] sm:$0xff]
    %v333 = vld [vmem:[#allocation7 + $0x118] sm:$0xff]
    %v334 = vld [vmem:[#allocation7 + $0x120] sm:$0xff]
    %v335 = vld [vmem:[#allocation7 + $0x128] sm:$0xff]
    %v336 = vld [vmem:[#allocation7 + $0x130] sm:$0xff]
    %v337 = vld [vmem:[#allocation7 + $0x138] sm:$0xff]
    %v338 = vld [vmem:[#allocation7 + $0x140] sm:$0xff]
    %v339 = vld [vmem:[#allocation7 + $0x148] sm:$0xff]
    %v340 = vld [vmem:[#allocation7 + $0x150] sm:$0xff]
    %v341 = vld [vmem:[#allocation7 + $0x158] sm:$0xff]
    %v342 = vld [vmem:[#allocation7 + $0x160] sm:$0xff]
    %v343 = vld [vmem:[#allocation7 + $0x168] sm:$0xff]
    %v344 = vld [vmem:[#allocation7 + $0x170] sm:$0xff]
    %v345 = vld [vmem:[#allocation7 + $0x178] sm:$0xff]
    %v346 = vld [vmem:[#allocation7 + $0x180] sm:$0xff]
    %v347 = vld [vmem:[#allocation7 + $0x188] sm:$0xff]
    %v348 = vld [vmem:[#allocation7 + $0x190] sm:$0xff]
    %v349 = vld [vmem:[#allocation7 + $0x198] sm:$0xff]
    %v350 = vld [vmem:[#allocation7 + $0x1a0] sm:$0xff]
    %v351 = vld [vmem:[#allocation7 + $0x1a8] sm:$0xff]
    %v352 = vld [vmem:[#allocation7 + $0x1b0] sm:$0xff]
    %v353 = vld [vmem:[#allocation7 + $0x1b8] sm:$0xff]
    %v354 = vld [vmem:[#allocation7 + $0x1c0] sm:$0xff]
    %v355 = vld [vmem:[#allocation7 + $0x1c8] sm:$0xff]
    %v356 = vld [vmem:[#allocation7 + $0x1d0] sm:$0xff]
    %v357 = vld [vmem:[#allocation7 + $0x1d8] sm:$0xff]
    %v358 = vld [vmem:[#allocation7 + $0x1e0] sm:$0xff]
    %v359 = vld [vmem:[#allocation7 + $0x1e8] sm:$0xff]
    %v360 = vld [vmem:[#allocation7 + $0x1f0] sm:$0xff]
    %v361 = vld [vmem:[#allocation7 + $0x1f8] sm:$0xff]
    %362 = vmatprep.subr.mxu0 0.0
    %363 = vmatpush1.msra.mxu0 %v298
    %364 = vmatprep.subr.mxu0 0.0
    %365 = vmatpush1.msra.mxu0 %v299
    %366 = vmatprep.subr.mxu0 0.0
    %367 = vmatpush1.msra.mxu0 %v300
    %368 = vmatprep.subr.mxu0 0.0
    %369 = vmatpush1.msra.mxu0 %v301
    %370 = vmatprep.subr.mxu0 0.0
    %371 = vmatpush1.msra.mxu0 %v302
    %372 = vmatprep.subr.mxu0 0.0
    %373 = vmatpush1.msra.mxu0 %v303
    %374 = vmatprep.subr.mxu0 0.0
    %375 = vmatpush1.msra.mxu0 %v304
    %376 = vmatprep.subr.mxu0 0.0
    %377 = vmatpush1.msra.mxu0 %v305
    %378 = vmatprep.subr.mxu0 0.0
    %379 = vmatpush1.msra.mxu0 %v306
    %380 = vmatprep.subr.mxu0 0.0
    %381 = vmatpush1.msra.mxu0 %v307
    %382 = vmatprep.subr.mxu0 0.0
    %383 = vmatpush1.msra.mxu0 %v308
    %384 = vmatprep.subr.mxu0 0.0
    %385 = vmatpush1.msra.mxu0 %v309
    %386 = vmatprep.subr.mxu0 0.0
    %387 = vmatpush1.msra.mxu0 %v310
    %388 = vmatprep.subr.mxu0 0.0
    %389 = vmatpush1.msra.mxu0 %v311
    %390 = vmatprep.subr.mxu0 0.0
    %391 = vmatpush1.msra.mxu0 %v312
    %392 = vmatprep.subr.mxu0 0.0
    %393 = vmatpush1.msra.mxu0 %v313
    %394 = vmatprep.subr.mxu0 0.0
    %395 = vmatpush1.msra.mxu0 %v314
    %396 = vmatprep.subr.mxu0 0.0
    %397 = vmatpush1.msra.mxu0 %v315
    %398 = vmatprep.subr.mxu0 0.0
    %399 = vmatpush1.msra.mxu0 %v316
    %400 = vmatprep.subr.mxu0 0.0
    %401 = vmatpush1.msra.mxu0 %v317
    %402 = vmatprep.subr.mxu0 0.0
    %403 = vmatpush1.msra.mxu0 %v318
    %404 = vmatprep.subr.mxu0 0.0
    %405 = vmatpush1.msra.mxu0 %v319
    %406 = vmatprep.subr.mxu0 0.0
    %407 = vmatpush1.msra.mxu0 %v320
    %408 = vmatprep.subr.mxu0 0.0
    %409 = vmatpush1.msra.mxu0 %v321
    %410 = vmatprep.subr.mxu0 0.0
    %411 = vmatpush1.msra.mxu0 %v322
    %412 = vmatprep.subr.mxu0 0.0
    %413 = vmatpush1.msra.mxu0 %v323
    %414 = vmatprep.subr.mxu0 0.0
    %415 = vmatpush1.msra.mxu0 %v324
    %416 = vmatprep.subr.mxu0 0.0
    %417 = vmatpush1.msra.mxu0 %v325
    %418 = vmatprep.subr.mxu0 0.0
    %419 = vmatpush1.msra.mxu0 %v326
    %420 = vmatprep.subr.mxu0 0.0
    %421 = vmatpush1.msra.mxu0 %v327
    %422 = vmatprep.subr.mxu0 0.0
    %423 = vmatpush1.msra.mxu0 %v328
    %424 = vmatprep.subr.mxu0 0.0
    %425 = vmatpush1.msra.mxu0 %v329
    %426 = vmatprep.mubr.f32.mxu0 %v295
    %427 = vmatmul.mubr.f32.gmra.mrb[0].mxu0 %v294
    %v428 = vpop.f32.mrb[0].mxu0
    %v429 = vadd.f32 0.0, %v428
    %v430 = vpop.f32.mrb[0].mxu0
    %431 = vdwg.mxu0
    %432 = vmatprep.subr.mxu0 0.0
    %433 = vmatpush1.msra.mxu0 %v330
    %434 = vmatprep.subr.mxu0 0.0
    %435 = vmatpush1.msra.mxu0 %v331
    %436 = vmatprep.subr.mxu0 0.0
    %437 = vmatpush1.msra.mxu0 %v332
    %438 = vmatprep.subr.mxu0 0.0
    %439 = vmatpush1.msra.mxu0 %v333
    %440 = vmatprep.subr.mxu0 0.0
    %441 = vmatpush1.msra.mxu0 %v334
    %442 = vmatprep.subr.mxu0 0.0
    %443 = vmatpush1.msra.mxu0 %v335
    %444 = vmatprep.subr.mxu0 0.0
    %445 = vmatpush1.msra.mxu0 %v336
    %446 = vmatprep.subr.mxu0 0.0
    %447 = vmatpush1.msra.mxu0 %v337
    %448 = vmatprep.subr.mxu0 0.0
    %449 = vmatpush1.msra.mxu0 %v338
    %450 = vmatprep.subr.mxu0 0.0
    %451 = vmatpush1.msra.mxu0 %v339
    %452 = vmatprep.subr.mxu0 0.0
    %453 = vmatpush1.msra.mxu0 %v340
    %454 = vmatprep.subr.mxu0 0.0
    %455 = vmatpush1.msra.mxu0 %v341
    %456 = vmatprep.subr.mxu0 0.0
    %457 = vmatpush1.msra.mxu0 %v342
    %458 = vmatprep.subr.mxu0 0.0
    %459 = vmatpush1.msra.mxu0 %v343
    %460 = vmatprep.subr.mxu0 0.0
    %461 = vmatpush1.msra.mxu0 %v344
    %462 = vmatprep.subr.mxu0 0.0
    %463 = vmatpush1.msra.mxu0 %v345
    %464 = vmatprep.subr.mxu0 0.0
    %465 = vmatpush1.msra.mxu0 %v346
    %466 = vmatprep.subr.mxu0 0.0
    %467 = vmatpush1.msra.mxu0 %v347
    %468 = vmatprep.subr.mxu0 0.0
    %469 = vmatpush1.msra.mxu0 %v348
    %470 = vmatprep.subr.mxu0 0.0
    %471 = vmatpush1.msra.mxu0 %v349
    %472 = vmatprep.subr.mxu0 0.0
    %473 = vmatpush1.msra.mxu0 %v350
    %474 = vmatprep.subr.mxu0 0.0
    %475 = vmatpush1.msra.mxu0 %v351
    %476 = vmatprep.subr.mxu0 0.0
    %477 = vmatpush1.msra.mxu0 %v352
    %478 = vmatprep.subr.mxu0 0.0
    %479 = vmatpush1.msra.mxu0 %v353
    %480 = vmatprep.subr.mxu0 0.0
    %481 = vmatpush1.msra.mxu0 %v354
    %482 = vmatprep.subr.mxu0 0.0
    %483 = vmatpush1.msra.mxu0 %v355
    %484 = vmatprep.subr.mxu0 0.0
    %485 = vmatpush1.msra.mxu0 %v356
    %486 = vmatprep.subr.mxu0 0.0
    %487 = vmatpush1.msra.mxu0 %v357
    %488 = vmatprep.subr.mxu0 0.0
    %489 = vmatpush1.msra.mxu0 %v358
    %490 = vmatprep.subr.mxu0 0.0
    %491 = vmatpush1.msra.mxu0 %v359
    %492 = vmatprep.subr.mxu0 0.0
    %493 = vmatpush1.msra.mxu0 %v360
    %494 = vmatprep.subr.mxu0 0.0
    %495 = vmatpush1.msra.mxu0 %v361
    %496 = vmatprep.mubr.f32.mxu0 %v297
    %497 = vmatmul.mubr.f32.gmra.mrb[0].mxu0 %v296
    %v498 = vpop.f32.mrb[0].mxu0
    %v499 = vadd.f32 %v429, %v498
    %v500 = vpop.f32.mrb[0].mxu0
    %501 = vdwg.mxu0
    %v502 = vadd.f32 %v57, %v499
    %503 = vst [vmem:[#allocation8] sm:$0xff] %v502
    // Predicated region
    $region30: #{tpu_custom_call.1} parent=1 // pred_check
      _
    $region31: #{tpu_custom_call.1} parent=1 // pred_check_branch
      %505 = sbr.rel (0) target = $region33
    $region32: #{tpu_custom_call.1} parent=1 // pred_region
      %s507 = ssub.s32 128, 128
      %508 = vsyncadd [#allocation4], %s507
      %s510 = sshll.u32 [#allocation8], 4
      %s511 = int_to_ptr.vmem [resolvable:$true] %s510
      %513 = dma.vmem_to_hbm [thread:$0]  %s511, 128, %s4, [#allocation4]
    $region33: #{tpu_custom_call.1} parent=1 // pred_fallthru
      _
    // Predicated region
    $region34: #{tpu_custom_call.1} parent=1 // pred_check
      _
    $region35: #{tpu_custom_call.1} parent=1 // pred_check_branch
      %515 = sbr.rel (0) target = $region37
    $region36: #{tpu_custom_call.1} parent=1 // pred_region
      %516 = dma.done [#allocation4], 128
    $region37: #{tpu_custom_call.1} parent=1 // pred_fallthru
      _
    %517 = vsyncpa [#allocation3], 1
    %518 = vsyncpa [#allocation6], 1
    %519 = vsyncpa [#allocation4], 1

</llo_original>
